<compile_context>
chip_gen: v7x
topology: tpu7x:2x2x1
jax: 0.10.0
libtpu: 0.0.40
codegen_flags: <defaults>
</compile_context>

<pallas_src>
import jax
import jax.numpy as jnp
from jax.experimental import pallas as pl
from jax.experimental.pallas import tpu as pltpu


# Below this many rows the custom-call + per-step overhead dominates; XLA's
# fused broadcast-multiply is faster.
_SMALL_BATCH_FAST_PATH = 1024


def _simple_intercept_kernel(x_ref, w_ref, o_ref):
    # x_ref: (1, TILE_B)       batch along lanes (lane-dense)
    # w_ref: (n_thetas, 1)     resident in VMEM across the whole grid
    # o_ref: (n_thetas, TILE_B)
    # One VPU broadcast multiply: o[t, b] = w[t, 0] * x[0, b].
    o_ref[...] = w_ref[...] * x_ref[...]


def _round_up(n, m):
    return ((n + m - 1) // m) * m


def simple_intercept(x, weight, *, tile_b=2048, transposed_output=False):
    """SimpleIntercept forward: y = x @ W.T.

    x: (B, 1), weight: (n_thetas, 1).
    Returns (B, n_thetas) by default; with transposed_output=True returns the
    lane-dense (n_thetas, B) layout directly (saves one XLA transpose when the
    consumer can accept it).
    """
    B, in_features = x.shape
    assert in_features == 1, "SimpleIntercept expects a single input feature."
    n_thetas = weight.shape[0]
    assert weight.shape == (n_thetas, 1)

    # Explicit dtype: compute and store everything in x.dtype.
    w = weight.astype(x.dtype)

    # Small-batch fast path (plain JAX broadcast multiply == x @ W.T).
    if B < _SMALL_BATCH_FAST_PATH:
        y = x * w.reshape(1, n_thetas)          # (B, 1) * (1, T) -> (B, T)
        return y.T if transposed_output else y

    # Lane-dense layout: batch axis on the lane (last) dimension.
    x_row = x.reshape(1, B)

    # Batch tile: multiple of 128 lanes, capped near the batch size.
    tb = max(128, min(_round_up(tile_b, 128), _round_up(B, 128)))
    # v7x has two TensorCores: keep at least two grid steps when possible.
    if pl.cdiv(B, tb) < 2 and B > 256:
        tb = _round_up(pl.cdiv(B, 2), 128)

    grid = (pl.cdiv(B, tb),)  # ragged last block is masked by Pallas

    out_t = pl.pallas_call(
        _simple_intercept_kernel,
        out_shape=jax.ShapeDtypeStruct((n_thetas, B), x.dtype),
        grid=grid,
        in_specs=[
            pl.BlockSpec((1, tb), lambda i: (0, i)),          # x tile, pipelined
            pl.BlockSpec((n_thetas, 1), lambda i: (0, 0)),    # weight, resident
        ],
        out_specs=pl.BlockSpec((n_thetas, tb), lambda i: (0, i)),
        compiler_params=pltpu.CompilerParams(
            dimension_semantics=("parallel",),
        ),
    )(x_row, w)

    if transposed_output:
        return out_t
    # One cheap XLA transpose on the 20-row result restores the module's
    # native (B, n_thetas) layout.
    return out_t.T


def make_simple_intercept_params(n_thetas=20, key=None):
    """Mirror SimpleIntercept.__init__: nn.Linear(1, n_thetas, bias=False).

    nn.Linear default init: U(-1/sqrt(fan_in), 1/sqrt(fan_in)), fan_in = 1.
    """
    if key is None:
        key = jax.random.PRNGKey(0)
    bound = 1.0
    return jax.random.uniform(
        key, (n_thetas, 1), dtype=jnp.float32, minval=-bound, maxval=bound
    )


if __name__ == "__main__":
    n_thetas = 20
    key = jax.random.PRNGKey(0)
    kx1, kx2, kx3, kw = jax.random.split(key, 4)
    weight = make_simple_intercept_params(n_thetas, key=kw)

    # 1) Tiny batch (module-scale test) -> small-batch fast path.
    x_small = jax.random.normal(kx1, (8, 1), dtype=jnp.float32)
    y_small = jax.block_until_ready(simple_intercept(x_small, weight))
    assert y_small.shape == (8, n_thetas)
    assert jnp.allclose(y_small, x_small @ weight.T, atol=1e-6, rtol=1e-6)

    # 2) Batch large enough to exercise the Pallas kernel (grid of 2 tiles).
    x_big = jax.random.normal(kx2, (4096, 1), dtype=jnp.float32)
    y_big = jax.block_until_ready(simple_intercept(x_big, weight))
    assert y_big.shape == (4096, n_thetas)
    assert jnp.allclose(y_big, x_big @ weight.T, atol=1e-6, rtol=1e-6)

    # 3) Ragged batch (not a multiple of the tile) -> masked last block,
    #    no wrapper pad/slice; also check the lane-dense output option.
    x_rag = jax.random.normal(kx3, (4133, 1), dtype=jnp.float32)
    y_rag = jax.block_until_ready(simple_intercept(x_rag, weight))
    y_rag_t = jax.block_until_ready(
        simple_intercept(x_rag, weight, transposed_output=True)
    )
    assert y_rag.shape == (4133, n_thetas)
    assert y_rag_t.shape == (n_thetas, 4133)
    assert jnp.allclose(y_rag, x_rag @ weight.T, atol=1e-6, rtol=1e-6)
    assert jnp.allclose(y_rag_t, (x_rag @ weight.T).T, atol=1e-6, rtol=1e-6)

    print("KERNEL_OK")
</pallas_src>

<mosaic_0001>
module attributes {stable_mosaic.version = 11 : i64} {
  func.func @_simple_intercept_kernel(%arg0: i32, %arg1: memref<1x2048xf32, #tpu.memory_space<vmem>>, %arg2: memref<20x1xf32, #tpu.memory_space<vmem>>, %arg3: memref<20x2048xf32, #tpu.memory_space<vmem>>) attributes {dimension_semantics = [#tpu.dimension_semantics<parallel>], iteration_bounds = array<i64: 2>, scalar_prefetch = 0 : i64, scratch_operands = 0 : i64, tpu.core_type = #tpu.core_type<tc>, window_params = [{transform_indices = @transform_0, window_bounds = array<i64: 1, 2048>}, {pipeline_mode = #tpu.pipeline_mode<synchronous>, transform_indices = @transform_1, window_bounds = array<i64: 20, 1>}, {transform_indices = @transform_2, window_bounds = array<i64: 20, 2048>}]} {
    %c0 = arith.constant 0 : index
    %c0_0 = arith.constant 0 : index
    %0 = vector.load %arg2[%c0, %c0_0] : memref<20x1xf32, #tpu.memory_space<vmem>>, vector<20x1xf32>
    %c0_1 = arith.constant 0 : index
    %c0_2 = arith.constant 0 : index
    %1 = vector.load %arg1[%c0_1, %c0_2] : memref<1x2048xf32, #tpu.memory_space<vmem>>, vector<1x2048xf32>
    %2 = vector.broadcast %0 : vector<20x1xf32> to vector<20x2048xf32>
    %3 = vector.broadcast %1 : vector<1x2048xf32> to vector<20x2048xf32>
    %4 = arith.mulf %2, %3 : vector<20x2048xf32>
    %c0_3 = arith.constant 0 : index
    %c0_4 = arith.constant 0 : index
    %5 = vector.load %arg3[%c0_3, %c0_4] : memref<20x2048xf32, #tpu.memory_space<vmem>>, vector<20x2048xf32>
    tpu.vector_store %arg3[%c0_3, %c0_4], %4 {strides = array<i32>} : memref<20x2048xf32, #tpu.memory_space<vmem>>, vector<20x2048xf32>,
    return
  }
  func.func @transform_0(%arg0: i32) -> (i32, i32) {
    %c0_i32 = arith.constant 0 : i32
    %c0_i32_0 = arith.constant 0 : i32
    return %c0_i32, %arg0 : i32, i32
  }
  func.func @transform_1(%arg0: i32) -> (i32, i32) {
    %c0_i32 = arith.constant 0 : i32
    %c0_i32_0 = arith.constant 0 : i32
    %c0_i32_1 = arith.constant 0 : i32
    return %c0_i32, %c0_i32_0 : i32, i32
  }
  func.func @transform_2(%arg0: i32) -> (i32, i32) {
    %c0_i32 = arith.constant 0 : i32
    %c0_i32_0 = arith.constant 0 : i32
    return %c0_i32, %arg0 : i32, i32
  }
}

</mosaic_0001>

<llo_original>
// kernel: tpu_custom_call.1
$region0: #{tpu_custom_call.1}
  #allocation0 [shape = 'u32[]', space=smem, size = 0x4, offset = 0x4, fixed_abs, tag = 'smem constant byte address 0x4 - core index']
  #allocation1 [shape = 'u32[144,128]{1,0:T(1,128)}', space=vmem, size = 0x12000, scoped, tag = 'internal scratch']
  %s0 = inlined_call_operand.hbm [shape: f32[1,4096], index: 0, kind: input, shape index: {}]
  %s1 = inlined_call_operand.vmem [shape: f32[20,1], index: 1, kind: input, shape index: {}]
  %s2 = inlined_call_operand.hbm [shape: f32[20,4096], index: 2, kind: output, shape index: {}]
  %s3 = sld [smem:[#allocation0]]
  $region45: #{tpu_custom_call.1} parent=0
    _
  %s5 = ssub.s32 1, %s3
  %s6 = scalar_select 0, %s5, %s3
  $region1: #{tpu_custom_call.1} parent=0
    #allocation2 [shape = 'u8[16384]{0}', space=vmem, size = 0x4000, scoped, tag = 'input window, operand 0']
    #allocation3 [shape = 's32[2]{0}', space=sflag, size = 0x8, scoped, tag = 'scoped memory for tpu_custom_call.1']
    #allocation4 [shape = 's32[2]{0}', space=sflag, size = 0x8, scoped, tag = 'scoped memory for tpu_custom_call.1']
    #allocation5 [shape = 'u8[393216]{0}', space=vmem, size = 0x60000, scoped, tag = 'output window, operand 0']
    %7 = vsyncpa [#allocation3], 0
    %s8 = scalar_lea.sflag [#allocation3], 1
    %9 = vsyncpa %s8, 0
    %10 = vsyncpa [#allocation4], 0
    %s11 = scalar_lea.sflag [#allocation4], 1
    %12 = vsyncpa %s11, 0
    loop: start=0, step=1, limit=4
    $region2: #{tpu_custom_call.1} parent=1 // loop_pre_header
      _
    $region3: #{tpu_custom_call.1} parent=1 // loop_header
      %s14 = sphi 0, %s18
      %p15 = scmp.ge.s32.totalorder %s14, 4
      %s24 = sphi 0, %s26
      %s27 = sphi 0, %s24
      %s28 = sphi 0, %s27
      %s44 = sphi 0, %s28
      %s48 = sphi 0, %s48
      %s50 = sphi 0, %s48
      %s51 = sphi 0, %s50
      %s65 = sphi 0, %s51
      %s71 = sphi 0, %s73
      %s74 = sphi 0, %s71
      %s75 = sphi 0, %s74
      %s91 = sphi 0, %s75
    $region4: #{tpu_custom_call.1} parent=1 // loop_header_branch
      %17 = sbr.rel (%p15) target = $region8
    $region5: #{tpu_custom_call.1} parent=1 // loop_body
      %s19 = ssub.s32 %s14, 1
      %s20 = ssub.s32 %s14, 2
      %s21 = sadd.s32 %s14, 1
      %s22 = ssub.s32 %s14, %s21
      %p23 = scmp.eq.s32.totalorder %s22, 0
      %s25 = sadd.s32 %s24, 1
      %s26 = scalar_select %p23, %s24, %s25
      %p29 = pneg %p23
      %p30 = scmp.eq.s32.totalorder %s14, 1
      %p31 = por %p29, %p30
      %p32 = scmp.ne.s32.totalorder %s24, %s27
      %p33 = scmp.eq.s32.totalorder %s14, 0
      %p34 = por %p32, %p33
      %p35 = scmp.ne.s32.totalorder %s24, %s27
      %p36 = scmp.eq.s32.totalorder %s19, 1
      %p37 = por %p35, %p36
      %p38 = scmp.ne.s32.totalorder %s27, %s28
      %p39 = scmp.eq.s32.totalorder %s19, 0
      %p40 = por %p38, %p39
      %p41 = scmp.ne.s32.totalorder %s27, %s28
      %p42 = scmp.eq.s32.totalorder %s20, 1
      %p43 = por %p41, %p42
      %p45 = scmp.ne.s32.totalorder %s28, %s44
      %p46 = scmp.eq.s32.totalorder %s20, 0
      %p47 = por %p45, %p46
      %s49 = sadd.s32 %s48, 1
      %p52 = scmp.eq.s32.totalorder %s14, 1
      %p53 = scmp.ne.s32.totalorder %s48, %s50
      %p54 = scmp.eq.s32.totalorder %s14, 0
      %p55 = por %p53, %p54
      %p56 = scmp.ne.s32.totalorder %s48, %s50
      %p57 = scmp.eq.s32.totalorder %s19, 1
      %p58 = por %p56, %p57
      %p59 = scmp.ne.s32.totalorder %s50, %s51
      %p60 = scmp.eq.s32.totalorder %s19, 0
      %p61 = por %p59, %p60
      %p62 = scmp.ne.s32.totalorder %s50, %s51
      %p63 = scmp.eq.s32.totalorder %s20, 1
      %p64 = por %p62, %p63
      %p66 = scmp.ne.s32.totalorder %s51, %s65
      %p67 = scmp.eq.s32.totalorder %s20, 0
      %p68 = por %p66, %p67
      %s69 = ssub.s32 %s14, %s21
      %p70 = scmp.eq.s32.totalorder %s69, 0
      %s72 = sadd.s32 %s71, 1
      %s73 = scalar_select %p70, %s71, %s72
      %p76 = pneg %p70
      %p77 = scmp.eq.s32.totalorder %s14, 1
      %p78 = por %p76, %p77
      %p79 = scmp.ne.s32.totalorder %s71, %s74
      %p80 = scmp.eq.s32.totalorder %s14, 0
      %p81 = por %p79, %p80
      %p82 = scmp.ne.s32.totalorder %s71, %s74
      %p83 = scmp.eq.s32.totalorder %s19, 1
      %p84 = por %p82, %p83
      %p85 = scmp.ne.s32.totalorder %s74, %s75
      %p86 = scmp.eq.s32.totalorder %s19, 0
      %p87 = por %p85, %p86
      %p88 = scmp.ne.s32.totalorder %s74, %s75
      %p89 = scmp.eq.s32.totalorder %s20, 1
      %p90 = por %p88, %p89
      %p92 = scmp.ne.s32.totalorder %s75, %s91
      %p93 = scmp.eq.s32.totalorder %s20, 0
      %p94 = por %p92, %p93
      %p95 = scmp.le.s32.totalorder 1, %s14
      %p96 = scmp.lt.s32.totalorder %s14, 3
      %p97 = pnand %p95, %p96
      %p98 = pneg %p97
      // Predicated region
      $region9: #{tpu_custom_call.1} parent=5 // pred_check
        _
      $region10: #{tpu_custom_call.1} parent=5 // pred_check_branch
        %100 = sbr.rel (%p97) target = $region12
      $region11: #{tpu_custom_call.1} parent=5 // pred_region
        %s101 = ssub.s32 %s14, 1
        // Predicated region
        $region13: #{tpu_custom_call.1} parent=11 // pred_check
          %p102 = pneg %p61
        $region14: #{tpu_custom_call.1} parent=11 // pred_check_branch
          %104 = sbr.rel (%p102) target = $region16
        $region15: #{tpu_custom_call.1} parent=11 // pred_region
          _
        $region16: #{tpu_custom_call.1} parent=11 // pred_fallthru
          _
      $region12: #{tpu_custom_call.1} parent=5 // pred_fallthru
        _
      %p105 = scmp.lt.s32.totalorder %s14, 2
      // Predicated region
      $region17: #{tpu_custom_call.1} parent=5 // pred_check
        %p106 = pneg %p105
      $region18: #{tpu_custom_call.1} parent=5 // pred_check_branch
        %108 = sbr.rel (%p106) target = $region20
      $region19: #{tpu_custom_call.1} parent=5 // pred_region
        // Predicated region
        $region21: #{tpu_custom_call.1} parent=19 // pred_check
          %p109 = pneg %p34
        $region22: #{tpu_custom_call.1} parent=19 // pred_check_branch
          %111 = sbr.rel (%p109) target = $region24
        $region23: #{tpu_custom_call.1} parent=19 // pred_region
          %s112 = sand.u32 %s24, 1
          %s113 = scalar_lea.sflag [#allocation3], %s112
          %s114 = sand.u32 %s24, 1
          %s115 = smul.addr %s114, 16
          %s116 = scalar_lea.vmem [#allocation2], %s115
          %s117 = smul.u32 16, %s14
          %s119 = ssub.s32 256, 256
          %120 = vsyncadd %s113, %s119
          %s121 = smul.addr %s117, 16
          %s122 = scalar_lea.hbm %s0, %s121
          %s124 = sshll.u32 %s116, 4
          %s125 = int_to_ptr.vmem [resolvable:$true] %s124
          %127 = dma.hbm_to_vmem [thread:$0]  %s122, 256, %s125, %s113
        $region24: #{tpu_custom_call.1} parent=19 // pred_fallthru
          _
      $region20: #{tpu_custom_call.1} parent=5 // pred_fallthru
        _
      %p128 = scmp.le.s32.totalorder 1, %s14
      %p129 = scmp.lt.s32.totalorder %s14, 3
      %p130 = pnand %p128, %p129
      %p131 = pneg %p130
      // Predicated region
      $region25: #{tpu_custom_call.1} parent=5 // pred_check
        _
      $region26: #{tpu_custom_call.1} parent=5 // pred_check_branch
        %133 = sbr.rel (%p130) target = $region28
      $region27: #{tpu_custom_call.1} parent=5 // pred_region
        %s134 = ssub.s32 %s14, 1
        %s135 = sand.u32 %s27, 1
        %s136 = scalar_lea.sflag [#allocation3], %s135
        %s137 = sand.u32 %s27, 1
        %s138 = smul.addr %s137, 16
        %s139 = scalar_lea.vmem [#allocation2], %s138
        // Predicated region
        $region29: #{tpu_custom_call.1} parent=27 // pred_check
          %p140 = pneg %p40
        $region30: #{tpu_custom_call.1} parent=27 // pred_check_branch
          %142 = sbr.rel (%p140) target = $region32
        $region31: #{tpu_custom_call.1} parent=27 // pred_region
          %143 = dma.done %s136, 256
        $region32: #{tpu_custom_call.1} parent=27 // pred_fallthru
          _
        %s144 = sand.u32 %s27, 1
        %s145 = scalar_lea.sflag [#allocation3], %s144
        %s146 = sand.u32 %s27, 1
        %s147 = smul.addr %s146, 16
        %s148 = scalar_lea.vmem [#allocation2], %s147
        %p149 = pneg %p40
        %p150 = pneg %p37
        %p151 = pneg %p61
        %p152 = pneg %p58
        %p153 = pneg %p87
        %p154 = pneg %p84
        %s155 = sand.u32 %s74, 1
        %s156 = scalar_lea.sflag [#allocation4], %s155
        %s157 = sand.u32 %s74, 1
        %s158 = smul.addr %s157, 384
        %s159 = scalar_lea.vmem [#allocation5], %s158
        %s160 = smul.u32 16, %s19
        %s161 = smul.u32 16, %s19
        %v162 = vld [vmem:[%s1] sm:$0xff]
        %v163 = vld [vmem:[%s1 + $0x8] sm:$0xff]
        %v164 = vld [vmem:[%s1 + $0x10] sm:$0xf]
        %v165 = vld [vmem:[%s139] sm:$0xff]
        %v166 = vld [vmem:[%s139 + $0x8] sm:$0xff]
        %168 = vset.pattern.permute.xlu0 0
        %169 = vperm.xlu0 %168, %v162
        %v170 = vpop.permute.xlu0 %169
        %173 = vset.pattern.permute.xlu0 0
        %174 = vperm.xlu0 %173, %v163
        %v175 = vpop.permute.xlu0 %174
        %178 = vset.pattern.permute.xlu0 0
        %179 = vperm.xlu0 %178, %v164
        %v180 = vpop.permute.xlu0 %179
        %v184 = vlaneseq
        %v185 = vshrl.u32 %v184, 7
        %v186 = vsub.s32 0, %v185
        %v187 = vrot.slane %v165, %v186
        %v188 = vlaneseq
        %v189 = vshrl.u32 %v188, 7
        %v190 = vsub.s32 1, %v189
        %v191 = vrot.slane %v165, %v190
        %v192 = vlaneseq
        %v193 = vshrl.u32 %v192, 7
        %v194 = vsub.s32 2, %v193
        %v195 = vrot.slane %v165, %v194
        %v196 = vlaneseq
        %v197 = vshrl.u32 %v196, 7
        %v198 = vsub.s32 3, %v197
        %v199 = vrot.slane %v165, %v198
        %v200 = vlaneseq
        %v201 = vshrl.u32 %v200, 7
        %v202 = vsub.s32 4, %v201
        %v203 = vrot.slane %v165, %v202
        %v204 = vlaneseq
        %v205 = vshrl.u32 %v204, 7
        %v206 = vsub.s32 5, %v205
        %v207 = vrot.slane %v165, %v206
        %v208 = vlaneseq
        %v209 = vshrl.u32 %v208, 7
        %v210 = vsub.s32 6, %v209
        %v211 = vrot.slane %v165, %v210
        %v212 = vlaneseq
        %v213 = vshrl.u32 %v212, 7
        %v214 = vsub.s32 7, %v213
        %v215 = vrot.slane %v165, %v214
        %v216 = vlaneseq
        %v217 = vshrl.u32 %v216, 7
        %v218 = vsub.s32 0, %v217
        %v219 = vrot.slane %v166, %v218
        %v220 = vlaneseq
        %v221 = vshrl.u32 %v220, 7
        %v222 = vsub.s32 1, %v221
        %v223 = vrot.slane %v166, %v222
        %v224 = vlaneseq
        %v225 = vshrl.u32 %v224, 7
        %v226 = vsub.s32 2, %v225
        %v227 = vrot.slane %v166, %v226
        %v228 = vlaneseq
        %v229 = vshrl.u32 %v228, 7
        %v230 = vsub.s32 3, %v229
        %v231 = vrot.slane %v166, %v230
        %v232 = vlaneseq
        %v233 = vshrl.u32 %v232, 7
        %v234 = vsub.s32 4, %v233
        %v235 = vrot.slane %v166, %v234
        %v236 = vlaneseq
        %v237 = vshrl.u32 %v236, 7
        %v238 = vsub.s32 5, %v237
        %v239 = vrot.slane %v166, %v238
        %v240 = vlaneseq
        %v241 = vshrl.u32 %v240, 7
        %v242 = vsub.s32 6, %v241
        %v243 = vrot.slane %v166, %v242
        %v244 = vlaneseq
        %v245 = vshrl.u32 %v244, 7
        %v246 = vsub.s32 7, %v245
        %v247 = vrot.slane %v166, %v246
        %v264 = vmul.f32 %v170, %v187
        %v265 = vmul.f32 %v170, %v191
        %v266 = vmul.f32 %v170, %v195
        %v267 = vmul.f32 %v170, %v199
        %v268 = vmul.f32 %v170, %v203
        %v269 = vmul.f32 %v170, %v207
        %v270 = vmul.f32 %v170, %v211
        %v271 = vmul.f32 %v170, %v215
        %v272 = vmul.f32 %v170, %v219
        %v273 = vmul.f32 %v170, %v223
        %v274 = vmul.f32 %v170, %v227
        %v275 = vmul.f32 %v170, %v231
        %v276 = vmul.f32 %v170, %v235
        %v277 = vmul.f32 %v170, %v239
        %v278 = vmul.f32 %v170, %v243
        %v279 = vmul.f32 %v170, %v247
        %v280 = vmul.f32 %v175, %v187
        %v281 = vmul.f32 %v175, %v191
        %v282 = vmul.f32 %v175, %v195
        %v283 = vmul.f32 %v175, %v199
        %v284 = vmul.f32 %v175, %v203
        %v285 = vmul.f32 %v175, %v207
        %v286 = vmul.f32 %v175, %v211
        %v287 = vmul.f32 %v175, %v215
        %v288 = vmul.f32 %v175, %v219
        %v289 = vmul.f32 %v175, %v223
        %v290 = vmul.f32 %v175, %v227
        %v291 = vmul.f32 %v175, %v231
        %v292 = vmul.f32 %v175, %v235
        %v293 = vmul.f32 %v175, %v239
        %v294 = vmul.f32 %v175, %v243
        %v295 = vmul.f32 %v175, %v247
        %v296 = vmul.f32 %v180, %v187
        %v297 = vmul.f32 %v180, %v191
        %v298 = vmul.f32 %v180, %v195
        %v299 = vmul.f32 %v180, %v199
        %v300 = vmul.f32 %v180, %v203
        %v301 = vmul.f32 %v180, %v207
        %v302 = vmul.f32 %v180, %v211
        %v303 = vmul.f32 %v180, %v215
        %v304 = vmul.f32 %v180, %v219
        %v305 = vmul.f32 %v180, %v223
        %v306 = vmul.f32 %v180, %v227
        %v307 = vmul.f32 %v180, %v231
        %v308 = vmul.f32 %v180, %v235
        %v309 = vmul.f32 %v180, %v239
        %v310 = vmul.f32 %v180, %v243
        %v311 = vmul.f32 %v180, %v247
        %312 = vst [vmem:[%s159] sm:$0xff] %v264
        %313 = vst [vmem:[%s159 + $0x8] sm:$0xff] %v265
        %314 = vst [vmem:[%s159 + $0x10] sm:$0xff] %v266
        %315 = vst [vmem:[%s159 + $0x18] sm:$0xff] %v267
        %316 = vst [vmem:[%s159 + $0x20] sm:$0xff] %v268
        %317 = vst [vmem:[%s159 + $0x28] sm:$0xff] %v269
        %318 = vst [vmem:[%s159 + $0x30] sm:$0xff] %v270
        %319 = vst [vmem:[%s159 + $0x38] sm:$0xff] %v271
        %320 = vst [vmem:[%s159 + $0x40] sm:$0xff] %v272
        %321 = vst [vmem:[%s159 + $0x48] sm:$0xff] %v273
        %322 = vst [vmem:[%s159 + $0x50] sm:$0xff] %v274
        %323 = vst [vmem:[%s159 + $0x58] sm:$0xff] %v275
        %324 = vst [vmem:[%s159 + $0x60] sm:$0xff] %v276
        %325 = vst [vmem:[%s159 + $0x68] sm:$0xff] %v277
        %326 = vst [vmem:[%s159 + $0x70] sm:$0xff] %v278
        %327 = vst [vmem:[%s159 + $0x78] sm:$0xff] %v279
        %328 = vst [vmem:[%s159 + $0x80] sm:$0xff] %v280
        %329 = vst [vmem:[%s159 + $0x88] sm:$0xff] %v281
        %330 = vst [vmem:[%s159 + $0x90] sm:$0xff] %v282
        %331 = vst [vmem:[%s159 + $0x98] sm:$0xff] %v283
        %332 = vst [vmem:[%s159 + $0xa0] sm:$0xff] %v284
        %333 = vst [vmem:[%s159 + $0xa8] sm:$0xff] %v285
        %334 = vst [vmem:[%s159 + $0xb0] sm:$0xff] %v286
        %335 = vst [vmem:[%s159 + $0xb8] sm:$0xff] %v287
        %336 = vst [vmem:[%s159 + $0xc0] sm:$0xff] %v288
        %337 = vst [vmem:[%s159 + $0xc8] sm:$0xff] %v289
        %338 = vst [vmem:[%s159 + $0xd0] sm:$0xff] %v290
        %339 = vst [vmem:[%s159 + $0xd8] sm:$0xff] %v291
        %340 = vst [vmem:[%s159 + $0xe0] sm:$0xff] %v292
        %341 = vst [vmem:[%s159 + $0xe8] sm:$0xff] %v293
        %342 = vst [vmem:[%s159 + $0xf0] sm:$0xff] %v294
        %343 = vst [vmem:[%s159 + $0xf8] sm:$0xff] %v295
        %344 = vst [vmem:[%s159 + $0x100] sm:$0xf] %v296
        %345 = vst [vmem:[%s159 + $0x108] sm:$0xf] %v297
        %346 = vst [vmem:[%s159 + $0x110] sm:$0xf] %v298
        %347 = vst [vmem:[%s159 + $0x118] sm:$0xf] %v299
        %348 = vst [vmem:[%s159 + $0x120] sm:$0xf] %v300
        %349 = vst [vmem:[%s159 + $0x128] sm:$0xf] %v301
        %350 = vst [vmem:[%s159 + $0x130] sm:$0xf] %v302
        %351 = vst [vmem:[%s159 + $0x138] sm:$0xf] %v303
        %352 = vst [vmem:[%s159 + $0x140] sm:$0xf] %v304
        %353 = vst [vmem:[%s159 + $0x148] sm:$0xf] %v305
        %354 = vst [vmem:[%s159 + $0x150] sm:$0xf] %v306
        %355 = vst [vmem:[%s159 + $0x158] sm:$0xf] %v307
        %356 = vst [vmem:[%s159 + $0x160] sm:$0xf] %v308
        %357 = vst [vmem:[%s159 + $0x168] sm:$0xf] %v309
        %358 = vst [vmem:[%s159 + $0x170] sm:$0xf] %v310
        %359 = vst [vmem:[%s159 + $0x178] sm:$0xf] %v311
        %s360 = sand.u32 %s74, 1
        %s361 = scalar_lea.sflag [#allocation4], %s360
        %s362 = sand.u32 %s74, 1
        %s363 = smul.addr %s362, 384
        %s364 = scalar_lea.vmem [#allocation5], %s363
        // Predicated region
        $region33: #{tpu_custom_call.1} parent=27 // pred_check
          %p365 = pneg %p84
        $region34: #{tpu_custom_call.1} parent=27 // pred_check_branch
          %367 = sbr.rel (%p365) target = $region36
        $region35: #{tpu_custom_call.1} parent=27 // pred_region
          %s368 = smul.u32 16, %s19
          %s370 = ssub.s32 6144, 6144
          %371 = vsyncadd %s361, %s370
          %s372 = smul.addr %s368, 128
          %s373 = scalar_lea.hbm %s2, %s372
          %s374 = sshll.u32 %s364, 4
          %s375 = int_to_ptr.vmem [resolvable:$true] %s374
          %380 = dma.vmem_to_hbm [thread:$0]  %s375, 6144, %s373, %s361, 2048, 4096, 128
        $region36: #{tpu_custom_call.1} parent=27 // pred_fallthru
          _
      $region28: #{tpu_custom_call.1} parent=5 // pred_fallthru
        _
      %p381 = scmp.le.s32.totalorder 2, %s14
      // Predicated region
      $region37: #{tpu_custom_call.1} parent=5 // pred_check
        %p382 = pneg %p381
      $region38: #{tpu_custom_call.1} parent=5 // pred_check_branch
        %384 = sbr.rel (%p382) target = $region40
      $region39: #{tpu_custom_call.1} parent=5 // pred_region
        %s385 = ssub.s32 %s14, 2
        // Predicated region
        $region41: #{tpu_custom_call.1} parent=39 // pred_check
          %p386 = pneg %p90
        $region42: #{tpu_custom_call.1} parent=39 // pred_check_branch
          %388 = sbr.rel (%p386) target = $region44
        $region43: #{tpu_custom_call.1} parent=39 // pred_region
          %s389 = sand.u32 %s75, 1
          %s390 = scalar_lea.sflag [#allocation4], %s389
          %s391 = sand.u32 %s75, 1
          %s392 = smul.addr %s391, 384
          %s393 = scalar_lea.vmem [#allocation5], %s392
          %394 = dma.done %s390, 6144
        $region44: #{tpu_custom_call.1} parent=39 // pred_fallthru
          _
      $region40: #{tpu_custom_call.1} parent=5 // pred_fallthru
        _
    $region6: #{tpu_custom_call.1} parent=1 // loop_footer
      %s18 = sadd.s32 1, %s14
    $region7: #{tpu_custom_call.1} parent=1 // loop_footer_branch
      %13 = sbr.rel target = $region3
    $region8: #{tpu_custom_call.1} parent=1 // loop_exit
      _
    %395 = vsyncpa [#allocation3], 1
    %s396 = scalar_lea.sflag [#allocation3], 1
    %397 = vsyncpa %s396, 1
    %398 = vsyncpa [#allocation4], 1
    %s399 = scalar_lea.sflag [#allocation4], 1
    %400 = vsyncpa %s399, 1

</llo_original>
